<compile_context>
chip_gen: v7x
topology: tpu7x:2x2x1
jax: 0.10.0
libtpu: 0.0.40
codegen_flags: <defaults>
</compile_context>

<pallas_src>
import random

import numpy as np
import jax
import jax.numpy as jnp
from jax.experimental import pallas as pl
from jax.experimental.pallas import tpu as pltpu


# -----------------------------------------------------------------------------
# Segmented lane reversal: reverse every contiguous length-S segment of the
# last (lane) axis of a (rows, L) block.  Implements y_flip without a matmul.
# -----------------------------------------------------------------------------

def _butterfly_reverse(L, S, forward_roll):
    """log2(S) XLU rotations + VPU selects.  Needs S a power of two, L % S == 0.

    forward_roll=True assumes pltpu.roll follows the jnp.roll convention
    (out[j] = in[(j - shift) % L]); False assumes the opposite convention.
    """
    steps = []
    b = S // 2
    while b >= 1:
        steps.append(b)
        b //= 2

    def rev(y):
        rows = y.shape[0]
        lane = jax.lax.broadcasted_iota(jnp.int32, (rows, L), 1)
        out = y
        for b in steps:
            plus_b = pltpu.roll(out, L - b, axis=1)   # want out[j] <- y[j + b]
            minus_b = pltpu.roll(out, b, axis=1)      # want out[j] <- y[j - b]
            if not forward_roll:
                plus_b, minus_b = minus_b, plus_b
            take_plus = (lane // b) % 2 == 0          # bit_b(lane) == 0
            out = jnp.where(take_plus, plus_b, minus_b)
        return out

    return rev


def _slice_concat_reverse(L, S):
    """Static per-lane gather (O(L) unrolled).  Last-resort fallback only."""
    def rev(y):
        cols = []
        for j in range(L):
            src = (j // S) * S + (S - 1 - (j % S))
            cols.append(y[:, src:src + 1])
        return jnp.concatenate(cols, axis=1)
    return rev


_REVERSE_CACHE = {}


def _get_segment_reverse(L, S):
    """Pick (once per (L, S)) a reversal implementation that both lowers on this
    Mosaic version and is bit-exact against a numpy reference."""
    key = (L, S)
    if key in _REVERSE_CACHE:
        return _REVERSE_CACHE[key]

    candidates = []
    if S & (S - 1) == 0 and L % S == 0:              # power-of-two segments
        candidates.append(_butterfly_reverse(L, S, True))
        candidates.append(_butterfly_reverse(L, S, False))
    if L == S:
        candidates.append(lambda y: y[:, ::-1])       # lax.rev, if supported
    candidates.append(_slice_concat_reverse(L, S))

    rows = 8
    test = np.arange(rows * L, dtype=np.float32).reshape(rows, L)
    want = test.reshape(rows, L // S, S)[:, :, ::-1].reshape(rows, L)

    chosen = None
    for fn in candidates:
        def probe_kernel(x_ref, o_ref, _fn=fn):
            o_ref[...] = _fn(x_ref[...])
        try:
            got = pl.pallas_call(
                probe_kernel,
                out_shape=jax.ShapeDtypeStruct((rows, L), jnp.float32),
            )(jnp.asarray(test))
            got = np.asarray(jax.block_until_ready(got))
        except Exception:
            continue
        if np.array_equal(got, want):
            chosen = fn
            break
    if chosen is None:
        raise RuntimeError(f"no working lane-reversal strategy for (L={L}, S={S})")
    _REVERSE_CACHE[key] = chosen
    return chosen


# -----------------------------------------------------------------------------
# Fused augmentation kernel.
# -----------------------------------------------------------------------------

def _make_kernel(reverse_fn, with_noise):
    # scales_ref: SMEM f32[2] = [sign (x_flip), noise_std]
    if with_noise:
        def kernel(scales_ref, x_ref, noise_ref, o_ref):
            y = x_ref[...]
            if reverse_fn is not None:           # y_flip: in-register reversal
                y = reverse_fn(y)
            # sign and std are SMEM scalars -> fused VPU multiply-adds.
            o_ref[...] = y * scales_ref[0] + noise_ref[...] * scales_ref[1]
    else:
        def kernel(scales_ref, x_ref, o_ref):
            y = x_ref[...]
            if reverse_fn is not None:
                y = reverse_fn(y)
            o_ref[...] = y * scales_ref[0]
    return kernel


def _pick_row_tile(R, L, max_rows):
    # Keep one (TR, L) f32 block at ~2 MiB so (x + noise + out) * double
    # buffering stays comfortably under the 32 MiB scoped-VMEM limit.
    cap = max(8, (2 * 1024 * 1024) // (L * 4))
    cap = min(cap, max_rows)
    if R <= cap:
        return R
    t = (cap // 8) * 8
    while t >= 8:
        if R % t == 0:
            return t
        t -= 8
    return R  # no clean multiple-of-8 divisor: fall back to a single block


_CALL_CACHE = {}


def _get_call(R, L, S, TR, with_noise, do_reverse):
    key = (R, L, S, TR, with_noise, do_reverse)
    if key in _CALL_CACHE:
        return _CALL_CACHE[key]

    reverse_fn = _get_segment_reverse(L, S) if do_reverse else None
    kernel = _make_kernel(reverse_fn, with_noise)

    block = pl.BlockSpec((TR, L), lambda i: (i, 0))
    in_specs = [pl.BlockSpec(memory_space=pltpu.MemorySpace.SMEM),  # scales
                block]                                              # x
    if with_noise:
        in_specs.append(block)                                      # noise

    call = pl.pallas_call(
        kernel,
        out_shape=jax.ShapeDtypeStruct((R, L), jnp.float32),
        grid=(R // TR,),
        in_specs=in_specs,
        out_specs=block,
        compiler_params=pltpu.CompilerParams(
            dimension_semantics=("parallel",),      # megacore split on v7x
            vmem_limit_bytes=32 * 1024 * 1024,
        ),
    )
    _CALL_CACHE[key] = call
    return call


def apply_augmentations(x, curr_augs, noise=None, std=0.1, max_rows_per_block=512):
    """Fused x_flip / y_flip / gaussian-noise.

    x:         (..., S) float array, e.g. (N, C, S) or (N, K, C, S).
    curr_augs: [x_flip, y_flip, gaussian_noise] host-side booleans.
    noise:     standard-normal samples, same shape as x; only required (and
               only streamed from HBM) when curr_augs[2] is True.
    """
    x_flip_on, y_flip_on, noise_on = (bool(a) for a in curr_augs)
    if noise_on and noise is None:
        raise ValueError("gaussian_noise selected but no noise samples given")

    shape = x.shape
    S = shape[-1]
    lead = 1
    for d in shape[:-1]:
        lead *= d

    # Lane-dense working layout (pure reshape, no transpose):
    #   S % 128 == 0          -> rows of length S
    #   small S dividing 128  -> pack 128 // S segments per 128-lane row
    #   otherwise             -> rows of length S (block last dim = full dim)
    if S % 128 == 0:
        L = S
    elif 128 % S == 0 and (lead * S) % 128 == 0:
        L = 128
    else:
        L = S
    R = (lead * S) // L
    TR = _pick_row_tile(R, L, max_rows_per_block)

    x2d = x.reshape(R, L).astype(jnp.float32)
    scales = jnp.array([-1.0 if x_flip_on else 1.0, std], dtype=jnp.float32)
    args = [scales, x2d]
    if noise_on:
        args.append(noise.reshape(R, L).astype(jnp.float32))

    do_reverse = y_flip_on and S > 1
    call = _get_call(R, L, S, TR, noise_on, do_reverse)
    out2d = call(*args)
    return out2d.reshape(shape)


def augmentator_forward(x, aug_list, key, p=0.3):
    """Mirror of Augmentator.forward: host-side RandomApply coin flips, redrawn
    until the chosen set differs from `aug_list`, then one fused kernel call."""
    curr_augs = list(aug_list)
    while curr_augs == list(aug_list):
        # RandomApply order: x_flip, y_flip, gaussian_noise
        curr_augs = [random.random() <= p for _ in range(3)]
    noise = None
    if curr_augs[2]:
        # torch's gaussian_noise draws fresh randn each call; same here.
        noise = jax.random.normal(key, x.shape, dtype=jnp.float32)
    out = apply_augmentations(x, curr_augs, noise=noise, std=0.1)
    return out, curr_augs, noise


if __name__ == "__main__":
    key = jax.random.PRNGKey(0)
    kx, kn, kb, kbn = jax.random.split(key, 4)

    def reference(x, augs, noise, std=0.1):
        r = np.asarray(x, dtype=np.float32)
        if augs[0]:
            r = r * np.float32(-1.0)
        if augs[1]:
            r = r[..., ::-1]
        if augs[2]:
            r = r + np.asarray(noise, dtype=np.float32) * np.float32(std)
        return r

    # Shapes consistent with the module: (N, C, S).
    x = jax.random.normal(kx, (2, 4, 16), dtype=jnp.float32)
    noise = jax.random.normal(kn, (2, 4, 16), dtype=jnp.float32)

    # Exhaustively check every host-side augmentation combination.
    for xf in (False, True):
        for yf in (False, True):
            for gn in (False, True):
                augs = [xf, yf, gn]
                out = apply_augmentations(x, augs, noise=noise if gn else None)
                out = np.asarray(jax.block_until_ready(out))
                np.testing.assert_allclose(out, reference(x, augs, noise),
                                           rtol=1e-6, atol=1e-6)

    # A second case where S is a multiple of 128 and the row grid has more
    # than one "parallel" block.
    x_big = jax.random.normal(kb, (4, 4, 128), dtype=jnp.float32)
    noise_big = jax.random.normal(kbn, (4, 4, 128), dtype=jnp.float32)
    out = apply_augmentations(x_big, [True, True, True], noise=noise_big,
                              max_rows_per_block=8)
    out = np.asarray(jax.block_until_ready(out))
    np.testing.assert_allclose(out, reference(x_big, [True, True, True], noise_big),
                               rtol=1e-6, atol=1e-6)

    # The module's forward pass (random re-draw until different from aug_list).
    random.seed(0)
    fwd_out, curr_augs, drawn_noise = augmentator_forward(
        x, aug_list=[], key=jax.random.PRNGKey(123), p=0.3)
    fwd_out = np.asarray(jax.block_until_ready(fwd_out))
    np.testing.assert_allclose(fwd_out, reference(x, curr_augs, drawn_noise),
                               rtol=1e-6, atol=1e-6)

    print("KERNEL_OK")
</pallas_src>

<mosaic_0001>
module attributes {stable_mosaic.version = 11 : i64} {
  func.func @kernel(%arg0: i32, %arg1: memref<2xf32, #tpu.memory_space<smem>>, %arg2: memref<1x128xf32, #tpu.memory_space<vmem>>, %arg3: memref<1x128xf32, #tpu.memory_space<vmem>>) attributes {dimension_semantics = [#tpu.dimension_semantics<parallel>], iteration_bounds = array<i64: 1>, scalar_prefetch = 0 : i64, scratch_operands = 0 : i64, tpu.core_type = #tpu.core_type<tc>, window_params = [{transform_indices = @transform_0, window_bounds = array<i64: 2>}, {transform_indices = @transform_1, window_bounds = array<i64: 1, 128>}, {transform_indices = @transform_2, window_bounds = array<i64: 1, 128>}]} {
    %c0 = arith.constant 0 : index
    %c0_0 = arith.constant 0 : index
    %0 = vector.load %arg2[%c0, %c0_0] : memref<1x128xf32, #tpu.memory_space<vmem>>, vector<1x128xf32>
    %c0_1 = arith.constant 0 : index
    %1 = memref.load %arg1[%c0_1] : memref<2xf32, #tpu.memory_space<smem>>
    %2 = vector.broadcast %1 : f32 to vector<1x128xf32>
    %3 = arith.mulf %0, %2 : vector<1x128xf32>
    %c0_2 = arith.constant 0 : index
    %c0_3 = arith.constant 0 : index
    %4 = vector.load %arg3[%c0_2, %c0_3] : memref<1x128xf32, #tpu.memory_space<vmem>>, vector<1x128xf32>
    tpu.vector_store %arg3[%c0_2, %c0_3], %3 {strides = array<i32>} : memref<1x128xf32, #tpu.memory_space<vmem>>, vector<1x128xf32>,
    return
  }
  func.func @transform_0(%arg0: i32) -> i32 {
    %c0_i32 = arith.constant 0 : i32
    %c0_i32_0 = arith.constant 0 : i32
    return %c0_i32 : i32
  }
  func.func @transform_1(%arg0: i32) -> (i32, i32) {
    %c0_i32 = arith.constant 0 : i32
    %c0_i32_0 = arith.constant 0 : i32
    return %arg0, %c0_i32 : i32, i32
  }
  func.func @transform_2(%arg0: i32) -> (i32, i32) {
    %c0_i32 = arith.constant 0 : i32
    %c0_i32_0 = arith.constant 0 : i32
    return %arg0, %c0_i32 : i32, i32
  }
}

</mosaic_0001>

<llo_original>
// kernel: tpu_custom_call.1
$region0: #{tpu_custom_call.1}
  #allocation0 [shape = 'u32[]', space=smem, size = 0x4, offset = 0x4, fixed_abs, tag = 'smem constant byte address 0x4 - core index']
  #allocation1 [shape = 'u32[144,128]{1,0:T(1,128)}', space=vmem, size = 0x12000, scoped, tag = 'internal scratch']
  %s0 = inlined_call_operand.hbm [shape: f32[2], index: 0, kind: input, shape index: {}]
  %s1 = inlined_call_operand.vmem [shape: f32[1,128], index: 1, kind: input, shape index: {}]
  %s2 = inlined_call_operand.hbm [shape: f32[1,128], index: 2, kind: output, shape index: {}]
  %s3 = sld [smem:[#allocation0]]
  $region22: #{tpu_custom_call.1} parent=0
    _
  %s5 = ssub.s32 1, %s3
  %s6 = scalar_select 0, %s5, %s3
  $region1: #{tpu_custom_call.1} parent=0
    #allocation2 [shape = 'u8[512]{0}', space=smem, size = 0x200, scoped, tag = 'input window, operand 0, single buffered']
    #allocation3 [shape = 's32[1]{0}', space=sflag, size = 0x4, scoped, tag = 'scoped memory for tpu_custom_call.1']
    #allocation4 [shape = 's32[1]{0}', space=sflag, size = 0x4, scoped, tag = 'scoped memory for tpu_custom_call.1']
    #allocation5 [shape = 'u8[512]{0}', space=vmem, size = 0x400, scoped, tag = 'output window, operand 0, single buffered']
    %7 = vsyncpa [#allocation4], 0
    %8 = vsyncpa [#allocation3], 0
    // Predicated region
    $region2: #{tpu_custom_call.1} parent=1 // pred_check
      _
    $region3: #{tpu_custom_call.1} parent=1 // pred_check_branch
      %10 = sbr.rel (0) target = $region5
    $region4: #{tpu_custom_call.1} parent=1 // pred_region
      %s12 = ssub.s32 16, 16
      %13 = vsyncadd [#allocation4], %s12
      %16 = dma.hbm_to_smem %s0, 16, [#allocation2], [#allocation4]
    $region5: #{tpu_custom_call.1} parent=1 // pred_fallthru
      _
    // Predicated region
    $region6: #{tpu_custom_call.1} parent=1 // pred_check
      _
    $region7: #{tpu_custom_call.1} parent=1 // pred_check_branch
      %18 = sbr.rel (0) target = $region9
    $region8: #{tpu_custom_call.1} parent=1 // pred_region
      _
    $region9: #{tpu_custom_call.1} parent=1 // pred_fallthru
      _
    // Predicated region
    $region10: #{tpu_custom_call.1} parent=1 // pred_check
      _
    $region11: #{tpu_custom_call.1} parent=1 // pred_check_branch
      %20 = sbr.rel (0) target = $region13
    $region12: #{tpu_custom_call.1} parent=1 // pred_region
      %21 = dma.done [#allocation4], 16
    $region13: #{tpu_custom_call.1} parent=1 // pred_fallthru
      _
    %22 = sfence
    %v23 = vld [vmem:[%s1] sm:$0x1]
    %s24 = sld [smem:[#allocation2]]
    %v25 = vstv %s24
    %v26 = vmul.f32 %v23, %v25
    %27 = vst [vmem:[#allocation5] sm:$0x1] %v26
    // Predicated region
    $region14: #{tpu_custom_call.1} parent=1 // pred_check
      _
    $region15: #{tpu_custom_call.1} parent=1 // pred_check_branch
      %29 = sbr.rel (0) target = $region17
    $region16: #{tpu_custom_call.1} parent=1 // pred_region
      %s31 = ssub.s32 16, 16
      %32 = vsyncadd [#allocation3], %s31
      %s34 = sshll.u32 [#allocation5], 4
      %s35 = int_to_ptr.vmem [resolvable:$true] %s34
      %37 = dma.vmem_to_hbm [thread:$0]  %s35, 16, %s2, [#allocation3]
    $region17: #{tpu_custom_call.1} parent=1 // pred_fallthru
      _
    // Predicated region
    $region18: #{tpu_custom_call.1} parent=1 // pred_check
      _
    $region19: #{tpu_custom_call.1} parent=1 // pred_check_branch
      %39 = sbr.rel (0) target = $region21
    $region20: #{tpu_custom_call.1} parent=1 // pred_region
      %40 = dma.done [#allocation3], 16
    $region21: #{tpu_custom_call.1} parent=1 // pred_fallthru
      _
    %41 = vsyncpa [#allocation3], 1
    %42 = vsyncpa [#allocation4], 1

</llo_original>
